<compile_context>
chip_gen: v7x
topology: tpu7x:2x2x1
jax: 0.10.0
libtpu: 0.0.40
codegen_flags: <defaults>
</compile_context>

<pallas_src>
import jax
import jax.numpy as jnp
from jax.experimental import pallas as pl
from jax.experimental.pallas import tpu as pltpu


def net_kernel(params_ref, x_ref, o_ref):
    # params_ref: SMEM f32[17], packed layout (all PyTorch (out, in) order):
    #   [0:6]   w1  (3, 2) row-major
    #   [6:9]   b1  (3,)
    #   [9:15]  w2  (2, 3) row-major
    #   [15:17] b2  (2,)
    x = x_ref[...]                 # (N, 2) f32 in VMEM
    x0 = x[:, 0:1]                 # (N, 1)
    x1 = x[:, 1:2]                 # (N, 1)

    def w1(j, i):
        return params_ref[2 * j + i]

    def b1(j):
        return params_ref[6 + j]

    def w2(j, i):
        return params_ref[9 + 3 * j + i]

    def b2(j):
        return params_ref[15 + j]

    # fc1 + ReLU: 3 hidden units, each an unrolled K=2 scalar*vector FMA (VPU).
    h = [
        jnp.maximum(x0 * w1(j, 0) + x1 * w1(j, 1) + b1(j), 0.0)
        for j in range(3)
    ]

    # fc2: 2 output units, each an unrolled K=3 scalar*vector FMA (VPU).
    z0 = h[0] * w2(0, 0) + h[1] * w2(0, 1) + h[2] * w2(0, 2) + b2(0)  # (N, 1)
    z1 = h[0] * w2(1, 0) + h[1] * w2(1, 1) + h[2] * w2(1, 2) + b2(1)  # (N, 1)

    # log_softmax over dim=0 (across batch rows), computed per output column.
    # No lane-axis concatenate: each column stays in its own vreg; the axis=0
    # (sublane) reductions go to the XLU and exp/log to the EUP.
    m0 = jnp.max(z0, axis=0, keepdims=True)                     # (1, 1)
    s0 = jnp.sum(jnp.exp(z0 - m0), axis=0, keepdims=True)       # (1, 1)
    o_ref[:, 0:1] = z0 - (m0 + jnp.log(s0))

    m1 = jnp.max(z1, axis=0, keepdims=True)
    s1 = jnp.sum(jnp.exp(z1 - m1), axis=0, keepdims=True)
    o_ref[:, 1:2] = z1 - (m1 + jnp.log(s1))


def pack_params(w1, b1, w2, b2):
    """Pack all parameters into one flat f32[17] vector.

    Call ONCE at parameter-init time (not per forward): the pack is a separate
    XLA fusion + tiny HBM round trip that would otherwise be paid every call.
    """
    return jnp.concatenate(
        [w1.reshape(-1), b1.reshape(-1), w2.reshape(-1), b2.reshape(-1)]
    ).astype(jnp.float32)


def net_forward(packed_params, x):
    """packed_params: f32[17] from pack_params(); x: (N, 2). Returns (N, 2)."""
    N = x.shape[0]
    return pl.pallas_call(
        net_kernel,
        out_shape=jax.ShapeDtypeStruct((N, 2), jnp.float32),
        in_specs=[
            pl.BlockSpec(memory_space=pltpu.MemorySpace.SMEM),   # packed params
            pl.BlockSpec(memory_space=pltpu.MemorySpace.VMEM),   # activations
        ],
        out_specs=pl.BlockSpec(memory_space=pltpu.MemorySpace.VMEM),
        # Advisory: kernel is pure fixed overhead (~100 FLOPs, ~200 B); help
        # XLA schedule neighboring ops tightly around it.
        cost_estimate=pl.CostEstimate(
            flops=22 * N,                 # fc1 + relu + fc2 + softmax arith
            transcendentals=2 * N + 2,    # exp per element + 2 logs
            bytes_accessed=17 * 4 + 2 * N * 2 * 4,
        ),
    )(packed_params, x)


def reference_forward(x, w1, b1, w2, b2):
    h = jnp.maximum(x @ w1.T + b1, 0.0)
    z = h @ w2.T + b2
    return z - jax.scipy.special.logsumexp(z, axis=0, keepdims=True)


if __name__ == "__main__":
    key = jax.random.PRNGKey(0)
    kx, k1, k2, k3, k4 = jax.random.split(key, 5)

    N = 8  # small batch
    x = jax.random.normal(kx, (N, 2), dtype=jnp.float32)

    # Deterministic parameter init, PyTorch-style shapes: weight is (out, in).
    w1 = jax.random.normal(k1, (3, 2), dtype=jnp.float32) * 0.5
    b1 = jax.random.normal(k2, (3,), dtype=jnp.float32) * 0.1
    w2 = jax.random.normal(k3, (2, 3), dtype=jnp.float32) * 0.5
    b2 = jax.random.normal(k4, (2,), dtype=jnp.float32) * 0.1

    # Pack once (init-time), reuse for every forward.
    params = jax.block_until_ready(pack_params(w1, b1, w2, b2))

    out = net_forward(params, x)
    jax.block_until_ready(out)

    ref = reference_forward(x, w1, b1, w2, b2)
    assert jnp.allclose(out, ref, atol=1e-5, rtol=1e-5), "mismatch vs reference"

    print("KERNEL_OK")
</pallas_src>

<mosaic_0001>
module attributes {stable_mosaic.version = 11 : i64} {
  func.func @net_kernel(%arg0: memref<17xf32, #tpu.memory_space<smem>>, %arg1: memref<8x2xf32, #tpu.memory_space<vmem>>, %arg2: memref<8x2xf32, #tpu.memory_space<vmem>>) attributes {dimension_semantics = [], scalar_prefetch = 0 : i64, scratch_operands = 0 : i64, tpu.core_type = #tpu.core_type<tc>} {
    %c0 = arith.constant 0 : index
    %c0_0 = arith.constant 0 : index
    %0 = vector.load %arg1[%c0, %c0_0] : memref<8x2xf32, #tpu.memory_space<vmem>>, vector<8x2xf32>
    %1 = vector.extract_strided_slice %0 {offsets = [0, 0], sizes = [8, 1], strides = [1, 1]} : vector<8x2xf32> to vector<8x1xf32>
    %2 = vector.extract_strided_slice %0 {offsets = [0, 1], sizes = [8, 1], strides = [1, 1]} : vector<8x2xf32> to vector<8x1xf32>
    %c0_1 = arith.constant 0 : index
    %3 = memref.load %arg0[%c0_1] : memref<17xf32, #tpu.memory_space<smem>>
    %4 = vector.broadcast %3 : f32 to vector<8x1xf32>
    %5 = arith.mulf %1, %4 : vector<8x1xf32>
    %c1 = arith.constant 1 : index
    %6 = memref.load %arg0[%c1] : memref<17xf32, #tpu.memory_space<smem>>
    %7 = vector.broadcast %6 : f32 to vector<8x1xf32>
    %8 = arith.mulf %2, %7 : vector<8x1xf32>
    %9 = arith.addf %5, %8 : vector<8x1xf32>
    %c6 = arith.constant 6 : index
    %10 = memref.load %arg0[%c6] : memref<17xf32, #tpu.memory_space<smem>>
    %11 = vector.broadcast %10 : f32 to vector<8x1xf32>
    %12 = arith.addf %9, %11 : vector<8x1xf32>
    %cst = arith.constant 0.000000e+00 : f32
    %13 = vector.broadcast %cst : f32 to vector<8x1xf32>
    %14 = arith.maximumf %12, %13 : vector<8x1xf32>
    %c2 = arith.constant 2 : index
    %15 = memref.load %arg0[%c2] : memref<17xf32, #tpu.memory_space<smem>>
    %16 = vector.broadcast %15 : f32 to vector<8x1xf32>
    %17 = arith.mulf %1, %16 : vector<8x1xf32>
    %c3 = arith.constant 3 : index
    %18 = memref.load %arg0[%c3] : memref<17xf32, #tpu.memory_space<smem>>
    %19 = vector.broadcast %18 : f32 to vector<8x1xf32>
    %20 = arith.mulf %2, %19 : vector<8x1xf32>
    %21 = arith.addf %17, %20 : vector<8x1xf32>
    %c7 = arith.constant 7 : index
    %22 = memref.load %arg0[%c7] : memref<17xf32, #tpu.memory_space<smem>>
    %23 = vector.broadcast %22 : f32 to vector<8x1xf32>
    %24 = arith.addf %21, %23 : vector<8x1xf32>
    %cst_2 = arith.constant 0.000000e+00 : f32
    %25 = vector.broadcast %cst_2 : f32 to vector<8x1xf32>
    %26 = arith.maximumf %24, %25 : vector<8x1xf32>
    %c4 = arith.constant 4 : index
    %27 = memref.load %arg0[%c4] : memref<17xf32, #tpu.memory_space<smem>>
    %28 = vector.broadcast %27 : f32 to vector<8x1xf32>
    %29 = arith.mulf %1, %28 : vector<8x1xf32>
    %c5 = arith.constant 5 : index
    %30 = memref.load %arg0[%c5] : memref<17xf32, #tpu.memory_space<smem>>
    %31 = vector.broadcast %30 : f32 to vector<8x1xf32>
    %32 = arith.mulf %2, %31 : vector<8x1xf32>
    %33 = arith.addf %29, %32 : vector<8x1xf32>
    %c8 = arith.constant 8 : index
    %34 = memref.load %arg0[%c8] : memref<17xf32, #tpu.memory_space<smem>>
    %35 = vector.broadcast %34 : f32 to vector<8x1xf32>
    %36 = arith.addf %33, %35 : vector<8x1xf32>
    %cst_3 = arith.constant 0.000000e+00 : f32
    %37 = vector.broadcast %cst_3 : f32 to vector<8x1xf32>
    %38 = arith.maximumf %36, %37 : vector<8x1xf32>
    %c9 = arith.constant 9 : index
    %39 = memref.load %arg0[%c9] : memref<17xf32, #tpu.memory_space<smem>>
    %40 = vector.broadcast %39 : f32 to vector<8x1xf32>
    %41 = arith.mulf %14, %40 : vector<8x1xf32>
    %c10 = arith.constant 10 : index
    %42 = memref.load %arg0[%c10] : memref<17xf32, #tpu.memory_space<smem>>
    %43 = vector.broadcast %42 : f32 to vector<8x1xf32>
    %44 = arith.mulf %26, %43 : vector<8x1xf32>
    %45 = arith.addf %41, %44 : vector<8x1xf32>
    %c11 = arith.constant 11 : index
    %46 = memref.load %arg0[%c11] : memref<17xf32, #tpu.memory_space<smem>>
    %47 = vector.broadcast %46 : f32 to vector<8x1xf32>
    %48 = arith.mulf %38, %47 : vector<8x1xf32>
    %49 = arith.addf %45, %48 : vector<8x1xf32>
    %c15 = arith.constant 15 : index
    %50 = memref.load %arg0[%c15] : memref<17xf32, #tpu.memory_space<smem>>
    %51 = vector.broadcast %50 : f32 to vector<8x1xf32>
    %52 = arith.addf %49, %51 : vector<8x1xf32>
    %c12 = arith.constant 12 : index
    %53 = memref.load %arg0[%c12] : memref<17xf32, #tpu.memory_space<smem>>
    %54 = vector.broadcast %53 : f32 to vector<8x1xf32>
    %55 = arith.mulf %14, %54 : vector<8x1xf32>
    %c13 = arith.constant 13 : index
    %56 = memref.load %arg0[%c13] : memref<17xf32, #tpu.memory_space<smem>>
    %57 = vector.broadcast %56 : f32 to vector<8x1xf32>
    %58 = arith.mulf %26, %57 : vector<8x1xf32>
    %59 = arith.addf %55, %58 : vector<8x1xf32>
    %c14 = arith.constant 14 : index
    %60 = memref.load %arg0[%c14] : memref<17xf32, #tpu.memory_space<smem>>
    %61 = vector.broadcast %60 : f32 to vector<8x1xf32>
    %62 = arith.mulf %38, %61 : vector<8x1xf32>
    %63 = arith.addf %59, %62 : vector<8x1xf32>
    %c16 = arith.constant 16 : index
    %64 = memref.load %arg0[%c16] : memref<17xf32, #tpu.memory_space<smem>>
    %65 = vector.broadcast %64 : f32 to vector<8x1xf32>
    %66 = arith.addf %63, %65 : vector<8x1xf32>
    %cst_4 = arith.constant dense<0xFF800000> : vector<1xf32>
    %67 = vector.multi_reduction <maximumf>, %52, %cst_4 [0] : vector<8x1xf32> to vector<1xf32>
    %68 = vector.shape_cast %67 : vector<1xf32> to vector<1x1xf32>
    %69 = vector.broadcast %68 : vector<1x1xf32> to vector<8x1xf32>
    %70 = arith.subf %52, %69 : vector<8x1xf32>
    %71 = math.exp %70 : vector<8x1xf32>
    %cst_5 = arith.constant dense<0.000000e+00> : vector<1xf32>
    %72 = vector.multi_reduction <add>, %71, %cst_5 [0] : vector<8x1xf32> to vector<1xf32>
    %73 = vector.shape_cast %72 : vector<1xf32> to vector<1x1xf32>
    %74 = math.log %73 : vector<1x1xf32>
    %75 = arith.addf %68, %74 : vector<1x1xf32>
    %76 = vector.broadcast %75 : vector<1x1xf32> to vector<8x1xf32>
    %77 = arith.subf %52, %76 : vector<8x1xf32>
    %c0_6 = arith.constant 0 : index
    %c0_7 = arith.constant 0 : index
    %78 = vector.load %arg2[%c0_6, %c0_7] : memref<8x2xf32, #tpu.memory_space<vmem>>, vector<8x1xf32>
    tpu.vector_store %arg2[%c0_6, %c0_7], %77 {strides = array<i32>} : memref<8x2xf32, #tpu.memory_space<vmem>>, vector<8x1xf32>,
    %cst_8 = arith.constant dense<0xFF800000> : vector<1xf32>
    %79 = vector.multi_reduction <maximumf>, %66, %cst_8 [0] : vector<8x1xf32> to vector<1xf32>
    %80 = vector.shape_cast %79 : vector<1xf32> to vector<1x1xf32>
    %81 = vector.broadcast %80 : vector<1x1xf32> to vector<8x1xf32>
    %82 = arith.subf %66, %81 : vector<8x1xf32>
    %83 = math.exp %82 : vector<8x1xf32>
    %cst_9 = arith.constant dense<0.000000e+00> : vector<1xf32>
    %84 = vector.multi_reduction <add>, %83, %cst_9 [0] : vector<8x1xf32> to vector<1xf32>
    %85 = vector.shape_cast %84 : vector<1xf32> to vector<1x1xf32>
    %86 = math.log %85 : vector<1x1xf32>
    %87 = arith.addf %80, %86 : vector<1x1xf32>
    %88 = vector.broadcast %87 : vector<1x1xf32> to vector<8x1xf32>
    %89 = arith.subf %66, %88 : vector<8x1xf32>
    %c0_10 = arith.constant 0 : index
    %c1_11 = arith.constant 1 : index
    %90 = vector.load %arg2[%c0_10, %c1_11] : memref<8x2xf32, #tpu.memory_space<vmem>>, vector<8x1xf32>
    tpu.vector_store %arg2[%c0_10, %c1_11], %89 {strides = array<i32>} : memref<8x2xf32, #tpu.memory_space<vmem>>, vector<8x1xf32>,
    return
  }
}

</mosaic_0001>

<llo_original>
// kernel: tpu_custom_call.1
$region0: #{tpu_custom_call.1}
  #allocation0 [shape = 'u32[]', space=smem, size = 0x4, offset = 0x4, fixed_abs, tag = 'smem constant byte address 0x4 - core index']
  #allocation1 [shape = 'u32[144,128]{1,0:T(1,128)}', space=vmem, size = 0x12000, scoped, tag = 'internal scratch']
  %s0 = inlined_call_operand.vmem [shape: f32[17], index: 0, kind: input, shape index: {}]
  %s1 = inlined_call_operand.vmem [shape: f32[8,2], index: 1, kind: input, shape index: {}]
  %s2 = inlined_call_operand.vmem [shape: f32[8,2], index: 2, kind: output, shape index: {}]
  %s3 = sld [smem:[#allocation0]]
  $region22: #{tpu_custom_call.1} parent=0
    _
  %s5 = ssub.s32 1, %s3
  %s6 = scalar_select 0, %s5, %s3
  $region1: #{tpu_custom_call.1} parent=0
    #allocation2 [shape = 'u8[512]{0}', space=smem, size = 0x200, scoped, tag = 'input window, operand 0, single buffered']
    #allocation3 [shape = 's32[1]{0}', space=sflag, size = 0x4, scoped, tag = 'scoped memory for tpu_custom_call.1']
    %7 = vsyncpa [#allocation3], 0
    // Predicated region
    $region2: #{tpu_custom_call.1} parent=1 // pred_check
      _
    $region3: #{tpu_custom_call.1} parent=1 // pred_check_branch
      %9 = sbr.rel (0) target = $region5
    $region4: #{tpu_custom_call.1} parent=1 // pred_region
      %s11 = ssub.s32 16, 16
      %12 = vsyncadd [#allocation3], %s11
      %s14 = sshll.u32 %s0, 4
      %s15 = int_to_ptr.vmem [resolvable:$true] %s14
      %17 = dma.vmem_to_smem %s15, 16, [#allocation2], [#allocation3]
    $region5: #{tpu_custom_call.1} parent=1 // pred_fallthru
      _
    // Predicated region
    $region6: #{tpu_custom_call.1} parent=1 // pred_check
      _
    $region7: #{tpu_custom_call.1} parent=1 // pred_check_branch
      %19 = sbr.rel (0) target = $region9
    $region8: #{tpu_custom_call.1} parent=1 // pred_region
      _
    $region9: #{tpu_custom_call.1} parent=1 // pred_fallthru
      _
    // Predicated region
    $region10: #{tpu_custom_call.1} parent=1 // pred_check
      _
    $region11: #{tpu_custom_call.1} parent=1 // pred_check_branch
      %21 = sbr.rel (0) target = $region13
    $region12: #{tpu_custom_call.1} parent=1 // pred_region
      %22 = dma.done [#allocation3], 16
    $region13: #{tpu_custom_call.1} parent=1 // pred_fallthru
      _
    %23 = sfence
    %v24 = vld [vmem:[%s1] sm:$0xff]
    %s25 = sld [smem:[#allocation2]]
    %v26 = vstv %s25
    %v27 = vmul.f32 %v24, %v26
    %s28 = sld [smem:[#allocation2 + $0x1]]
    %v29 = vstv %s28
    %v30 = vmul.f32 %v24, %v29
    %32 = vrot.lane.b32.xlu0 %v30, 127
    %v33 = vpop.permute.xlu0 %32
    %v35 = vadd.f32 %v27, %v33
    %s36 = sld [smem:[#allocation2 + $0x6]]
    %v37 = vstv %s36
    %v38 = vadd.f32 %v35, %v37
    %v39 = vmax.f32 %v38, 0.0
    %s40 = sld [smem:[#allocation2 + $0x2]]
    %v41 = vstv %s40
    %v42 = vmul.f32 %v24, %v41
    %s43 = sld [smem:[#allocation2 + $0x3]]
    %v44 = vstv %s43
    %v45 = vmul.f32 %v24, %v44
    %47 = vrot.lane.b32.xlu0 %v45, 127
    %v48 = vpop.permute.xlu0 %47
    %v50 = vadd.f32 %v42, %v48
    %s51 = sld [smem:[#allocation2 + $0x7]]
    %v52 = vstv %s51
    %v53 = vadd.f32 %v50, %v52
    %v54 = vmax.f32 %v53, 0.0
    %s55 = sld [smem:[#allocation2 + $0x4]]
    %v56 = vstv %s55
    %v57 = vmul.f32 %v24, %v56
    %s58 = sld [smem:[#allocation2 + $0x5]]
    %v59 = vstv %s58
    %v60 = vmul.f32 %v24, %v59
    %62 = vrot.lane.b32.xlu0 %v60, 127
    %v63 = vpop.permute.xlu0 %62
    %v65 = vadd.f32 %v57, %v63
    %s66 = sld [smem:[#allocation2 + $0x8]]
    %v67 = vstv %s66
    %v68 = vadd.f32 %v65, %v67
    %v69 = vmax.f32 %v68, 0.0
    %s70 = sld [smem:[#allocation2 + $0x9]]
    %v71 = vstv %s70
    %v72 = vmul.f32 %v39, %v71
    %s73 = sld [smem:[#allocation2 + $0xa]]
    %v74 = vstv %s73
    %v75 = vmul.f32 %v54, %v74
    %v76 = vadd.f32 %v72, %v75
    %s77 = sld [smem:[#allocation2 + $0xb]]
    %v78 = vstv %s77
    %v79 = vmul.f32 %v69, %v78
    %v80 = vadd.f32 %v76, %v79
    %s81 = sld [smem:[#allocation2 + $0xf]]
    %v82 = vstv %s81
    %v83 = vadd.f32 %v80, %v82
    %s84 = sld [smem:[#allocation2 + $0xc]]
    %v85 = vstv %s84
    %v86 = vmul.f32 %v39, %v85
    %s87 = sld [smem:[#allocation2 + $0xd]]
    %v88 = vstv %s87
    %v89 = vmul.f32 %v54, %v88
    %v90 = vadd.f32 %v86, %v89
    %s91 = sld [smem:[#allocation2 + $0xe]]
    %v92 = vstv %s91
    %v93 = vmul.f32 %v69, %v92
    %v94 = vadd.f32 %v90, %v93
    %s95 = sld [smem:[#allocation2 + $0x10]]
    %v96 = vstv %s95
    %v97 = vadd.f32 %v94, %v96
    %vm98 = vcmask 7168
    %v99 = vsel %vm98, %v83, -inf
    %v100 = vrot.slane %v99, 4
    %v101 = vmax.f32 %v99, %v100
    %v102 = vrot.slane %v101, 2
    %v103 = vmax.f32 %v101, %v102
    %v104 = vrot.slane %v103, 1
    %v105 = vmax.f32 %v103, %v104
    %v106 = vsub.f32 %v83, %v105
    %v107 = vmul.f32 %v106, 1.442695
    %v108 = vpow.pop %v107
    %v109 = vsel %vm98, %v108, 0.0
    %v110 = vrot.slane %v109, 4
    %v111 = vadd.f32 %v109, %v110
    %v112 = vrot.slane %v111, 2
    %v113 = vadd.f32 %v111, %v112
    %v114 = vrot.slane %v113, 1
    %v115 = vadd.f32 %v113, %v114
    %v116 = vlog2.pop %v115
    %v117 = vmul.f32 %v116, 0.6931472
    %v118 = vadd.f32 %v105, %v117
    %v119 = vsub.f32 %v83, %v118
    %120 = vst.msk [vmem:[%s2] sm:$0xff] %vm98, %v119
    %v121 = vsel %vm98, %v97, -inf
    %v122 = vrot.slane %v121, 4
    %v123 = vmax.f32 %v121, %v122
    %v124 = vrot.slane %v123, 2
    %v125 = vmax.f32 %v123, %v124
    %v126 = vrot.slane %v125, 1
    %v127 = vmax.f32 %v125, %v126
    %v128 = vsub.f32 %v97, %v127
    %v129 = vmul.f32 %v128, 1.442695
    %v130 = vpow.pop %v129
    %v131 = vsel %vm98, %v130, 0.0
    %v132 = vrot.slane %v131, 4
    %v133 = vadd.f32 %v131, %v132
    %v134 = vrot.slane %v133, 2
    %v135 = vadd.f32 %v133, %v134
    %v136 = vrot.slane %v135, 1
    %v137 = vadd.f32 %v135, %v136
    %v138 = vlog2.pop %v137
    %v139 = vmul.f32 %v138, 0.6931472
    %v140 = vadd.f32 %v127, %v139
    %v141 = vsub.f32 %v97, %v140
    %143 = vrot.lane.b32.xlu0 %v141, 1
    %v144 = vpop.permute.xlu0 %143
    %vm146 = vcmask 15368
    %147 = vst.msk [vmem:[%s2] sm:$0xff] %vm146, %v144
    // Predicated region
    $region14: #{tpu_custom_call.1} parent=1 // pred_check
      _
    $region15: #{tpu_custom_call.1} parent=1 // pred_check_branch
      %149 = sbr.rel (0) target = $region17
    $region16: #{tpu_custom_call.1} parent=1 // pred_region
      _
    $region17: #{tpu_custom_call.1} parent=1 // pred_fallthru
      _
    // Predicated region
    $region18: #{tpu_custom_call.1} parent=1 // pred_check
      _
    $region19: #{tpu_custom_call.1} parent=1 // pred_check_branch
      %151 = sbr.rel (0) target = $region21
    $region20: #{tpu_custom_call.1} parent=1 // pred_region
      _
    $region21: #{tpu_custom_call.1} parent=1 // pred_fallthru
      _
    %152 = vsyncpa [#allocation3], 1

</llo_original>
